<compile_context>
chip_gen: v7x
topology: tpu7x:2x2x1
jax: 0.10.0
libtpu: 0.0.40
codegen_flags: <defaults>
</compile_context>

<pallas_src>
import jax
import jax.numpy as jnp
from jax.experimental import pallas as pl
from jax.experimental.pallas import tpu as pltpu


# ----------------------------------------------------------------------------
# Kernel
# ----------------------------------------------------------------------------
def _linear_kernel(x_ref, w_ref, b_ref, o_ref):
    """One (tm, tn) f32 output tile; K is the innermost ("arbitrary") grid axis.

    x_ref: (tm, tk)  activations (f32 or bf16)
    w_ref: (tk, tn)  weight, pre-transposed to (in, out) layout
    b_ref: (1,  tn)  bias (f32)
    o_ref: (tm, tn)  f32 output tile. Its block index is independent of k, so
                     it stays resident in VMEM across the K axis and doubles as
                     the accumulator (no separate scratch -> more VMEM headroom).
    """
    k = pl.program_id(2)

    @pl.when(k == 0)
    def _():
        # Initialize the accumulator with the broadcast bias: removes the
        # full-tile VPU add from the writeback step.
        o_ref[...] = jnp.broadcast_to(b_ref[...], o_ref.shape)

    # Plain (M,K) x (K,N) contraction -> MXU, f32 accumulate.
    o_ref[...] += jnp.dot(x_ref[...], w_ref[...],
                          preferred_element_type=jnp.float32)


# ----------------------------------------------------------------------------
# Tiling helpers
# ----------------------------------------------------------------------------
def _cdiv(a, b):
    return -(-a // b)


def _round_up(x, m):
    return ((x + m - 1) // m) * m


def _split_dim(padded, cap, align, min_tiles=1):
    """Split `padded` (a multiple of `align`) into `nt` equal, `align`-aligned
    tiles of size <= cap, choosing nt to minimize total padding."""
    best = None
    nt0 = max(min_tiles, _cdiv(padded, cap))
    for nt in range(nt0, nt0 + 6):
        tile = _round_up(_cdiv(padded, nt), align)
        cand = (tile * nt, nt, tile)  # least padding first, then fewest tiles
        if best is None or cand < best:
            best = cand
    total, nt, tile = best
    return tile, total, nt


def _vmem_limit_bytes():
    # Generation-aware scoped-VMEM limit: ~75% of physical, capped at 96 MiB
    # (v5e/v6e have 128 MiB physical, v7x only 64 MiB). Fallback is v7x-safe.
    try:
        physical = int(pltpu.get_tpu_info().vmem_capacity_bytes)
    except Exception:
        physical = 64 << 20
    return min(physical * 3 // 4, 96 << 20)


_TM_CAP, _TN_CAP, _TK_CAP = 512, 1024, 512


def _choose_tiles(Mp, Kp, Np, in_itemsize, vmem_budget):
    m_align = max(8, 32 // in_itemsize)  # 8 for f32, 16 for bf16
    tm_cap, tn_cap, tk_cap = _TM_CAP, _TN_CAP, _TK_CAP
    while True:
        tm, Mp2, ntm = _split_dim(Mp, tm_cap, m_align)
        tn, Np2, ntn = _split_dim(Np, tn_cap, 128)
        tk, Kp2, ntk = _split_dim(Kp, tk_cap, 128)
        # Megacore guard (v7x has 2 TCs): keep at least one parallel grid axis
        # with extent >= 2 so the second core is not idle.
        if ntm * ntn == 1:
            if Np >= 256:
                tn, Np2, ntn = _split_dim(Np, tn_cap, 128, min_tiles=2)
            elif Mp >= 2 * m_align:
                tm, Mp2, ntm = _split_dim(Mp, tm_cap, m_align, min_tiles=2)
        # Double-buffered footprint: x, W tiles, bias (sublane-padded), and the
        # resident f32 output/accumulator tile.
        footprint = ((2 * tm * tk + 2 * tk * tn) * in_itemsize
                     + 2 * 8 * tn * 4 + 2 * tm * tn * 4)
        if footprint <= vmem_budget:
            return (tm, tn, tk), (Mp2, Np2, Kp2), (ntm, ntn, ntk)
        # Defensive shrink (rarely triggered with the caps above).
        if tn_cap > 128:
            tn_cap //= 2
        elif tk_cap > 128:
            tk_cap //= 2
        elif tm_cap > m_align:
            tm_cap //= 2
        else:
            return (tm, tn, tk), (Mp2, Np2, Kp2), (ntm, ntn, ntk)


# ----------------------------------------------------------------------------
# Wrapper
# ----------------------------------------------------------------------------
def prepare_adaptor_weight(weight):
    """One-time prep: PyTorch (out, in) layout -> (in, out) for the kernel."""
    return weight.T


def adaptor_forward(x, weight, bias, *, weight_is_transposed=False,
                    compute_dtype=None, force_pallas=False):
    """Pallas equivalent of Adaptor.forward (nn.Linear): y = x @ W^T + b.

    x:      (..., K) float32
    weight: (N, K) float32 (PyTorch layout) or (K, N) if weight_is_transposed
    bias:   (N,)   float32
    compute_dtype: None (keep f32) or jnp.bfloat16 to cast x/W at the kernel
                   boundary (f32 accumulation kept; ~3x MXU throughput, half
                   the HBM bytes, looser numerics).
    """
    orig_leading = x.shape[:-1]
    K = x.shape[-1]
    if weight_is_transposed:
        K2, N = weight.shape
        w_kn = weight
    else:
        N, K2 = weight.shape
        # One XLA transpose per call; call prepare_adaptor_weight() once at
        # model-prep time to avoid even that.
        w_kn = weight.T
    assert K == K2, "weight / input dim mismatch"

    x2 = x.reshape(-1, K)
    M = x2.shape[0]
    out_dtype = jnp.float32

    # Tiny-shape gate: per-step overhead + 128-lane padding would dominate.
    tiny = (M < 16) or (K < 128) or (N < 128) or (M * N * K < 64 * 128 * 128)
    if tiny and not force_pallas:
        y = (x2 @ w_kn + bias).astype(out_dtype)
        return y.reshape(*orig_leading, N)

    in_dtype = jnp.dtype(compute_dtype) if compute_dtype is not None else jnp.dtype(x2.dtype)
    in_itemsize = in_dtype.itemsize
    m_align = max(8, 32 // in_itemsize)

    vmem_limit = _vmem_limit_bytes()
    Mp0, Kp0, Np0 = _round_up(M, m_align), _round_up(K, 128), _round_up(N, 128)
    (tm, tn, tk), (Mp, Np, Kp), (ntm, ntn, ntk) = _choose_tiles(
        Mp0, Kp0, Np0, in_itemsize, int(vmem_limit * 0.6))

    xp = jnp.pad(x2, ((0, Mp - M), (0, Kp - K))) if (Mp != M or Kp != K) else x2
    wp = jnp.pad(w_kn, ((0, Kp - K), (0, Np - N))) if (Kp != K or Np != N) else w_kn
    bp = (jnp.pad(bias, (0, Np - N)) if Np != N else bias).reshape(1, Np)

    xp = xp.astype(in_dtype)
    wp = wp.astype(in_dtype)
    bp = bp.astype(jnp.float32)

    grid = (ntm, ntn, ntk)

    cost = pl.CostEstimate(
        flops=2 * Mp * Np * Kp,
        transcendentals=0,
        # x is re-streamed once per N tile, W once per M tile.
        bytes_accessed=in_itemsize * (Mp * Kp * ntn + Kp * Np * ntm)
                       + 4 * (Mp * Np + Np),
    )

    out = pl.pallas_call(
        _linear_kernel,
        out_shape=jax.ShapeDtypeStruct((Mp, Np), out_dtype),
        grid_spec=pltpu.PrefetchScalarGridSpec(
            num_scalar_prefetch=0,
            grid=grid,
            in_specs=[
                pl.BlockSpec((tm, tk), lambda i, j, k: (i, k)),   # x tile
                pl.BlockSpec((tk, tn), lambda i, j, k: (k, j)),   # W^T tile (K, N)
                pl.BlockSpec((1, tn), lambda i, j, k: (0, j)),    # bias tile
            ],
            out_specs=pl.BlockSpec((tm, tn), lambda i, j, k: (i, j)),
        ),
        compiler_params=pltpu.CompilerParams(
            dimension_semantics=("parallel", "parallel", "arbitrary"),
            vmem_limit_bytes=int(vmem_limit),
        ),
        cost_estimate=cost,
    )(xp, wp, bp)

    y = out[:M, :N]
    return y.reshape(*orig_leading, N)


def init_adaptor_params(key, input_dim, output_dim):
    """Deterministic init matching nn.Linear's default (uniform +/- 1/sqrt(fan_in))."""
    kw, kb = jax.random.split(key)
    bound = 1.0 / jnp.sqrt(jnp.float32(input_dim))
    weight = jax.random.uniform(kw, (output_dim, input_dim), jnp.float32, -bound, bound)
    bias = jax.random.uniform(kb, (output_dim,), jnp.float32, -bound, bound)
    return weight, bias


# ----------------------------------------------------------------------------
# Demo / self-check
# ----------------------------------------------------------------------------
if __name__ == "__main__":
    key = jax.random.PRNGKey(0)
    k_x0, k_p0, k_x1, k_p1 = jax.random.split(key, 4)

    # 1) Original tiny demo shape (8 x 32 -> 16): takes the XLA fallback path.
    batch, input_dim, output_dim = 8, 32, 16
    x_small = jax.random.normal(k_x0, (batch, input_dim), jnp.float32)
    w_small, b_small = init_adaptor_params(k_p0, input_dim, output_dim)
    y_small = jax.block_until_ready(adaptor_forward(x_small, w_small, b_small))
    ref_small = x_small @ w_small.T + b_small
    assert y_small.shape == (batch, output_dim)
    assert jnp.allclose(y_small, ref_small, atol=1e-5, rtol=1e-5)

    # 2) Kernel path: f32, pre-transposed weight, K grid extent > 1, and a
    #    parallel grid axis >= 2 (megacore guard).
    M, K, N = 256, 1024, 384
    x_big = jax.random.normal(k_x1, (M, K), jnp.float32)
    w_big, b_big = init_adaptor_params(k_p1, K, N)
    w_big_t = prepare_adaptor_weight(w_big)          # one-time (K, N) layout
    y_big = jax.block_until_ready(
        adaptor_forward(x_big, w_big_t, b_big, weight_is_transposed=True))
    ref_big = x_big @ w_big.T + b_big
    assert y_big.shape == (M, N)
    assert jnp.allclose(y_big, ref_big, atol=1e-3, rtol=1e-3)

    # 3) Kernel path with non-aligned shapes -> exercises the minimal padding.
    M3, K3, N3 = 100, 300, 200
    x3 = jax.random.normal(k_x0, (M3, K3), jnp.float32)
    w3, b3 = init_adaptor_params(k_p0, K3, N3)
    y3 = jax.block_until_ready(adaptor_forward(x3, w3, b3, force_pallas=True))
    ref3 = x3 @ w3.T + b3
    assert y3.shape == (M3, N3)
    assert jnp.allclose(y3, ref3, atol=1e-3, rtol=1e-3)

    # 4) Optional bf16 compute path (f32 accumulation), loose tolerance.
    y_bf16 = jax.block_until_ready(
        adaptor_forward(x_big, w_big, b_big, compute_dtype=jnp.bfloat16))
    assert y_bf16.shape == (M, N)
    assert jnp.allclose(y_bf16, ref_big, atol=5e-2, rtol=5e-2)

    print("KERNEL_OK")
</pallas_src>

<mosaic_0001>
module attributes {stable_mosaic.version = 11 : i64} {
  func.func @_linear_kernel(%arg0: i32, %arg1: i32, %arg2: i32, %arg3: memref<256x512xf32, #tpu.memory_space<vmem>>, %arg4: memref<512x128xf32, #tpu.memory_space<vmem>>, %arg5: memref<1x128xf32, #tpu.memory_space<vmem>>, %arg6: memref<256x128xf32, #tpu.memory_space<vmem>>) attributes {dimension_semantics = [#tpu.dimension_semantics<parallel>, #tpu.dimension_semantics<parallel>, #tpu.dimension_semantics<arbitrary>], iteration_bounds = array<i64: 1, 3, 2>, scalar_prefetch = 0 : i64, scratch_operands = 0 : i64, tpu.core_type = #tpu.core_type<tc>, window_params = [{transform_indices = @transform_0, window_bounds = array<i64: 256, 512>}, {transform_indices = @transform_1, window_bounds = array<i64: 512, 128>}, {transform_indices = @transform_2, window_bounds = array<i64: 1, 128>}, {transform_indices = @transform_3, window_bounds = array<i64: 256, 128>}]} {
    %c0_i32 = arith.constant 0 : i32
    %0 = arith.cmpi eq, %arg2, %c0_i32 : i32
    %1 = arith.extui %0 : i1 to i32
    %c0_i32_0 = arith.constant 0 : i32
    %2 = arith.cmpi ne, %1, %c0_i32_0 : i32
    scf.if %2 {
      %c0_8 = arith.constant 0 : index
      %c0_9 = arith.constant 0 : index
      %9 = vector.load %arg5[%c0_8, %c0_9] : memref<1x128xf32, #tpu.memory_space<vmem>>, vector<1x128xf32>
      %10 = vector.shape_cast %9 : vector<1x128xf32> to vector<1x128xf32>
      %11 = vector.broadcast %10 : vector<1x128xf32> to vector<256x128xf32>
      %c0_10 = arith.constant 0 : index
      %c0_11 = arith.constant 0 : index
      %12 = vector.load %arg6[%c0_10, %c0_11] : memref<256x128xf32, #tpu.memory_space<vmem>>, vector<256x128xf32>
      tpu.vector_store %arg6[%c0_10, %c0_11], %11 {strides = array<i32>} : memref<256x128xf32, #tpu.memory_space<vmem>>, vector<256x128xf32>,
    } else {
    }
    %c0 = arith.constant 0 : index
    %c0_1 = arith.constant 0 : index
    %3 = vector.load %arg6[%c0, %c0_1] : memref<256x128xf32, #tpu.memory_space<vmem>>, vector<256x128xf32>
    %c0_2 = arith.constant 0 : index
    %c0_3 = arith.constant 0 : index
    %4 = vector.load %arg3[%c0_2, %c0_3] : memref<256x512xf32, #tpu.memory_space<vmem>>, vector<256x512xf32>
    %c0_4 = arith.constant 0 : index
    %c0_5 = arith.constant 0 : index
    %5 = vector.load %arg4[%c0_4, %c0_5] : memref<512x128xf32, #tpu.memory_space<vmem>>, vector<512x128xf32>
    %cst = arith.constant dense<0.000000e+00> : vector<256x128xf32>
    %6 = tpu.matmul %4, %5, %cst {dimension_numbers = #tpu.dot_dimension_numbers<[1], [0], [0], [1], [0, 0, 1, 1], [], []>} : vector<256x512xf32>, vector<512x128xf32>, vector<256x128xf32> -> vector<256x128xf32>
    %7 = arith.addf %3, %6 : vector<256x128xf32>
    %c0_6 = arith.constant 0 : index
    %c0_7 = arith.constant 0 : index
    %8 = vector.load %arg6[%c0_6, %c0_7] : memref<256x128xf32, #tpu.memory_space<vmem>>, vector<256x128xf32>
    tpu.vector_store %arg6[%c0_6, %c0_7], %7 {strides = array<i32>} : memref<256x128xf32, #tpu.memory_space<vmem>>, vector<256x128xf32>,
    return
  }
  func.func @transform_0(%arg0: i32, %arg1: i32, %arg2: i32) -> (i32, i32) {
    %c0_i32 = arith.constant 0 : i32
    return %arg0, %arg2 : i32, i32
  }
  func.func @transform_1(%arg0: i32, %arg1: i32, %arg2: i32) -> (i32, i32) {
    %c0_i32 = arith.constant 0 : i32
    return %arg2, %arg1 : i32, i32
  }
  func.func @transform_2(%arg0: i32, %arg1: i32, %arg2: i32) -> (i32, i32) {
    %c0_i32 = arith.constant 0 : i32
    %c0_i32_0 = arith.constant 0 : i32
    return %c0_i32, %arg1 : i32, i32
  }
  func.func @transform_3(%arg0: i32, %arg1: i32, %arg2: i32) -> (i32, i32) {
    %c0_i32 = arith.constant 0 : i32
    return %arg0, %arg1 : i32, i32
  }
}

</mosaic_0001>

<llo_original>
// kernel: tpu_custom_call.1
$region0: #{tpu_custom_call.1}
  #allocation0 [shape = 'u32[]', space=smem, size = 0x4, offset = 0x4, fixed_abs, tag = 'smem constant byte address 0x4 - core index']
  #allocation1 [shape = 'u32[144,128]{1,0:T(1,128)}', space=vmem, size = 0x12000, scoped, tag = 'internal scratch']
  %s0 = inlined_call_operand.hbm [shape: f32[256,1024], index: 0, kind: input, shape index: {}]
  %s1 = inlined_call_operand.hbm [shape: f32[1024,384], index: 1, kind: input, shape index: {}]
  %s2 = inlined_call_operand.hbm [shape: f32[1,384], index: 2, kind: input, shape index: {}]
  %s3 = inlined_call_operand.hbm [shape: f32[256,384], index: 3, kind: output, shape index: {}]
  %s4 = sld [smem:[#allocation0]]
  $region61: #{tpu_custom_call.1} parent=0
    _
  %s6 = ssub.s32 1, %s4
  %s7 = scalar_select 0, %s6, %s4
  $region1: #{tpu_custom_call.1} parent=0
    #allocation2 [shape = 'u8[1048576]{0}', space=vmem, size = 0x100000, scoped, tag = 'input window, operand 0']
    #allocation3 [shape = 's32[2]{0}', space=sflag, size = 0x8, scoped, tag = 'scoped memory for tpu_custom_call.1']
    #allocation4 [shape = 's32[2]{0}', space=sflag, size = 0x8, scoped, tag = 'scoped memory for tpu_custom_call.1']
    #allocation5 [shape = 'u8[524288]{0}', space=vmem, size = 0x80000, scoped, tag = 'input window, operand 1']
    #allocation6 [shape = 's32[2]{0}', space=sflag, size = 0x8, scoped, tag = 'scoped memory for tpu_custom_call.1']
    #allocation7 [shape = 'u8[1024]{0}', space=vmem, size = 0x400, scoped, tag = 'input window, operand 2']
    #allocation8 [shape = 'u8[262144]{0}', space=vmem, size = 0x40000, scoped, tag = 'output window, operand 0']
    %8 = vsyncpa [#allocation3], 0
    %s9 = scalar_lea.sflag [#allocation3], 1
    %10 = vsyncpa %s9, 0
    %11 = vsyncpa [#allocation6], 0
    %s12 = scalar_lea.sflag [#allocation6], 1
    %13 = vsyncpa %s12, 0
    %14 = vsyncpa [#allocation4], 0
    %s15 = scalar_lea.sflag [#allocation4], 1
    %16 = vsyncpa %s15, 0
    loop: start=0, step=1, limit=8
    $region2: #{tpu_custom_call.1} parent=1 // loop_pre_header
      _
    $region3: #{tpu_custom_call.1} parent=1 // loop_header
      %s18 = sphi 0, %s22
      %p19 = scmp.ge.s32.totalorder %s18, 8
      %s25 = sphi 0, %s44
      %s26 = sphi 0, %s40
      %s27 = sphi 0, %s36
      %s28 = sphi 0, %s25
      %s29 = sphi 0, %s26
      %s30 = sphi 0, %s27
      %s31 = sphi 0, %s28
      %s32 = sphi 0, %s29
      %s33 = sphi 0, %s30
      %s49 = sphi 0, %s51
      %s52 = sphi 0, %s49
      %s53 = sphi 0, %s52
      %s69 = sphi 0, %s53
      %s77 = sphi 0, %s79
      %s80 = sphi 0, %s77
      %s81 = sphi 0, %s80
      %s97 = sphi 0, %s81
      %s103 = sphi 0, %s105
      %s106 = sphi 0, %s103
      %s107 = sphi 0, %s106
      %s123 = sphi 0, %s107
      %s131 = sphi 0, %s133
      %s134 = sphi 0, %s131
      %s135 = sphi 0, %s134
      %s151 = sphi 0, %s135
    $region4: #{tpu_custom_call.1} parent=1 // loop_header_branch
      %21 = sbr.rel (%p19) target = $region8
    $region5: #{tpu_custom_call.1} parent=1 // loop_body
      %s23 = ssub.s32 %s18, 1
      %s24 = ssub.s32 %s18, 2
      %s34 = sadd.s32 1, %s27
      %p35 = scmp.ge.s32.totalorder %s34, 2
      %s36 = scalar_select %p35, 0, %s34
      %s37 = sadd.s32 1, %s26
      %s38 = scalar_select %p35, %s37, %s26
      %p39 = scmp.ge.s32.totalorder %s38, 3
      %s40 = scalar_select %p39, 0, %s38
      %s41 = sadd.s32 1, %s25
      %s42 = scalar_select %p39, %s41, %s25
      %p43 = scmp.ge.s32.totalorder %s42, 1
      %s44 = scalar_select %p43, 0, %s42
      %s45 = ssub.s32 %s25, %s44
      %s46 = ssub.s32 %s27, %s36
      %s47 = sor.u32 %s45, %s46
      %p48 = scmp.eq.s32.totalorder %s47, 0
      %s50 = sadd.s32 %s49, 1
      %s51 = scalar_select %p48, %s49, %s50
      %p54 = pneg %p48
      %p55 = scmp.eq.s32.totalorder %s18, 5
      %p56 = por %p54, %p55
      %p57 = scmp.ne.s32.totalorder %s49, %s52
      %p58 = scmp.eq.s32.totalorder %s18, 0
      %p59 = por %p57, %p58
      %p60 = scmp.ne.s32.totalorder %s49, %s52
      %p61 = scmp.eq.s32.totalorder %s23, 5
      %p62 = por %p60, %p61
      %p63 = scmp.ne.s32.totalorder %s52, %s53
      %p64 = scmp.eq.s32.totalorder %s23, 0
      %p65 = por %p63, %p64
      %p66 = scmp.ne.s32.totalorder %s52, %s53
      %p67 = scmp.eq.s32.totalorder %s24, 5
      %p68 = por %p66, %p67
      %p70 = scmp.ne.s32.totalorder %s53, %s69
      %p71 = scmp.eq.s32.totalorder %s24, 0
      %p72 = por %p70, %p71
      %s73 = ssub.s32 %s27, %s36
      %s74 = ssub.s32 %s26, %s40
      %s75 = sor.u32 %s73, %s74
      %p76 = scmp.eq.s32.totalorder %s75, 0
      %s78 = sadd.s32 %s77, 1
      %s79 = scalar_select %p76, %s77, %s78
      %p82 = pneg %p76
      %p83 = scmp.eq.s32.totalorder %s18, 5
      %p84 = por %p82, %p83
      %p85 = scmp.ne.s32.totalorder %s77, %s80
      %p86 = scmp.eq.s32.totalorder %s18, 0
      %p87 = por %p85, %p86
      %p88 = scmp.ne.s32.totalorder %s77, %s80
      %p89 = scmp.eq.s32.totalorder %s23, 5
      %p90 = por %p88, %p89
      %p91 = scmp.ne.s32.totalorder %s80, %s81
      %p92 = scmp.eq.s32.totalorder %s23, 0
      %p93 = por %p91, %p92
      %p94 = scmp.ne.s32.totalorder %s80, %s81
      %p95 = scmp.eq.s32.totalorder %s24, 5
      %p96 = por %p94, %p95
      %p98 = scmp.ne.s32.totalorder %s81, %s97
      %p99 = scmp.eq.s32.totalorder %s24, 0
      %p100 = por %p98, %p99
      %s101 = ssub.s32 %s26, %s40
      %p102 = scmp.eq.s32.totalorder %s101, 0
      %s104 = sadd.s32 %s103, 1
      %s105 = scalar_select %p102, %s103, %s104
      %p108 = pneg %p102
      %p109 = scmp.eq.s32.totalorder %s18, 5
      %p110 = por %p108, %p109
      %p111 = scmp.ne.s32.totalorder %s103, %s106
      %p112 = scmp.eq.s32.totalorder %s18, 0
      %p113 = por %p111, %p112
      %p114 = scmp.ne.s32.totalorder %s103, %s106
      %p115 = scmp.eq.s32.totalorder %s23, 5
      %p116 = por %p114, %p115
      %p117 = scmp.ne.s32.totalorder %s106, %s107
      %p118 = scmp.eq.s32.totalorder %s23, 0
      %p119 = por %p117, %p118
      %p120 = scmp.ne.s32.totalorder %s106, %s107
      %p121 = scmp.eq.s32.totalorder %s24, 5
      %p122 = por %p120, %p121
      %p124 = scmp.ne.s32.totalorder %s107, %s123
      %p125 = scmp.eq.s32.totalorder %s24, 0
      %p126 = por %p124, %p125
      %s127 = ssub.s32 %s25, %s44
      %s128 = ssub.s32 %s26, %s40
      %s129 = sor.u32 %s127, %s128
      %p130 = scmp.eq.s32.totalorder %s129, 0
      %s132 = sadd.s32 %s131, 1
      %s133 = scalar_select %p130, %s131, %s132
      %p136 = pneg %p130
      %p137 = scmp.eq.s32.totalorder %s18, 5
      %p138 = por %p136, %p137
      %p139 = scmp.ne.s32.totalorder %s131, %s134
      %p140 = scmp.eq.s32.totalorder %s18, 0
      %p141 = por %p139, %p140
      %p142 = scmp.ne.s32.totalorder %s131, %s134
      %p143 = scmp.eq.s32.totalorder %s23, 5
      %p144 = por %p142, %p143
      %p145 = scmp.ne.s32.totalorder %s134, %s135
      %p146 = scmp.eq.s32.totalorder %s23, 0
      %p147 = por %p145, %p146
      %p148 = scmp.ne.s32.totalorder %s134, %s135
      %p149 = scmp.eq.s32.totalorder %s24, 5
      %p150 = por %p148, %p149
      %p152 = scmp.ne.s32.totalorder %s135, %s151
      %p153 = scmp.eq.s32.totalorder %s24, 0
      %p154 = por %p152, %p153
      %p155 = scmp.le.s32.totalorder 1, %s18
      %p156 = scmp.lt.s32.totalorder %s18, 7
      %p157 = pnand %p155, %p156
      %p158 = pneg %p157
      // Predicated region
      $region9: #{tpu_custom_call.1} parent=5 // pred_check
        _
      $region10: #{tpu_custom_call.1} parent=5 // pred_check_branch
        %160 = sbr.rel (%p157) target = $region12
      $region11: #{tpu_custom_call.1} parent=5 // pred_region
        %s161 = ssub.s32 %s18, 1
      $region12: #{tpu_custom_call.1} parent=5 // pred_fallthru
        _
      %p162 = scmp.lt.s32.totalorder %s18, 6
      // Predicated region
      $region13: #{tpu_custom_call.1} parent=5 // pred_check
        %p163 = pneg %p162
      $region14: #{tpu_custom_call.1} parent=5 // pred_check_branch
        %165 = sbr.rel (%p163) target = $region16
      $region15: #{tpu_custom_call.1} parent=5 // pred_region
        // Predicated region
        $region17: #{tpu_custom_call.1} parent=15 // pred_check
          %p166 = pneg %p59
        $region18: #{tpu_custom_call.1} parent=15 // pred_check_branch
          %168 = sbr.rel (%p166) target = $region20
        $region19: #{tpu_custom_call.1} parent=15 // pred_region
          %s169 = sand.u32 %s49, 1
          %s170 = scalar_lea.sflag [#allocation3], %s169
          %s171 = sand.u32 %s49, 1
          %s172 = smul.addr %s171, 1024
          %s173 = scalar_lea.vmem [#allocation2], %s172
          %s174 = smul.u32 32, %s25
          %s175 = smul.u32 4, %s27
          %s177 = ssub.s32 16384, 16384
          %178 = vsyncadd %s170, %s177
          %s179 = smul.addr %s174, 8
          %s180 = sadd.s32 %s175, %s179
          %s181 = smul.addr %s180, 128
          %s182 = scalar_lea.hbm %s0, %s181
          %s183 = sshll.u32 %s173, 4
          %s184 = int_to_ptr.vmem [resolvable:$true] %s183
          %189 = dma.hbm_to_vmem [thread:$0]  %s182, 16384, %s184, %s170, 1024, 512, 32
        $region20: #{tpu_custom_call.1} parent=15 // pred_fallthru
          _
        // Predicated region
        $region21: #{tpu_custom_call.1} parent=15 // pred_check
          %p190 = pneg %p87
        $region22: #{tpu_custom_call.1} parent=15 // pred_check_branch
          %192 = sbr.rel (%p190) target = $region24
        $region23: #{tpu_custom_call.1} parent=15 // pred_region
          %s193 = sand.u32 %s18, 1
          %s194 = scalar_lea.sflag [#allocation6], %s193
          %s195 = sand.u32 %s77, 1
          %s196 = smul.addr %s195, 512
          %s197 = scalar_lea.vmem [#allocation5], %s196
          %s198 = smul.u32 64, %s27
          %s200 = ssub.s32 8192, 8192
          %201 = vsyncadd %s194, %s200
          %s202 = smul.addr %s198, 3
          %s203 = sadd.s32 %s26, %s202
          %s204 = smul.addr %s203, 128
          %s205 = scalar_lea.hbm %s1, %s204
          %s206 = sshll.u32 %s197, 4
          %s207 = int_to_ptr.vmem [resolvable:$true] %s206
          %212 = dma.hbm_to_vmem [thread:$0]  %s205, 8192, %s207, %s194, 384, 128, 8
        $region24: #{tpu_custom_call.1} parent=15 // pred_fallthru
          _
        // Predicated region
        $region25: #{tpu_custom_call.1} parent=15 // pred_check
          %p213 = pneg %p113
        $region26: #{tpu_custom_call.1} parent=15 // pred_check_branch
          %215 = sbr.rel (%p213) target = $region28
        $region27: #{tpu_custom_call.1} parent=15 // pred_region
          %s216 = sand.u32 %s18, 1
          %s217 = scalar_lea.sflag [#allocation6], %s216
          %s218 = sand.u32 %s103, 1
          %s219 = scalar_lea.vmem [#allocation7], %s218
          %s221 = ssub.s32 16, 16
          %222 = vsyncadd %s217, %s221
          %s223 = smul.addr %s26, 16
          %s224 = scalar_lea.hbm %s2, %s223
          %s226 = sshll.u32 %s219, 4
          %s227 = int_to_ptr.vmem [resolvable:$true] %s226
          %229 = dma.hbm_to_vmem [thread:$0]  %s224, 16, %s227, %s217
        $region28: #{tpu_custom_call.1} parent=15 // pred_fallthru
          _
      $region16: #{tpu_custom_call.1} parent=5 // pred_fallthru
        _
      %p230 = scmp.le.s32.totalorder 1, %s18
      %p231 = scmp.lt.s32.totalorder %s18, 7
      %p232 = pnand %p230, %p231
      %p233 = pneg %p232
      // Predicated region
      $region29: #{tpu_custom_call.1} parent=5 // pred_check
        _
      $region30: #{tpu_custom_call.1} parent=5 // pred_check_branch
        %235 = sbr.rel (%p232) target = $region32
      $region31: #{tpu_custom_call.1} parent=5 // pred_region
        %s236 = ssub.s32 %s18, 1
        %s237 = sand.u32 %s52, 1
        %s238 = scalar_lea.sflag [#allocation3], %s237
        %s239 = sand.u32 %s52, 1
        %s240 = smul.addr %s239, 1024
        %s241 = scalar_lea.vmem [#allocation2], %s240
        // Predicated region
        $region33: #{tpu_custom_call.1} parent=31 // pred_check
          %p242 = pneg %p65
        $region34: #{tpu_custom_call.1} parent=31 // pred_check_branch
          %244 = sbr.rel (%p242) target = $region36
        $region35: #{tpu_custom_call.1} parent=31 // pred_region
          %245 = dma.done %s238, 16384
        $region36: #{tpu_custom_call.1} parent=31 // pred_fallthru
          _
        %s246 = sand.u32 %s23, 1
        %s247 = scalar_lea.sflag [#allocation6], %s246
        %s248 = sand.u32 %s80, 1
        %s249 = smul.addr %s248, 512
        %s250 = scalar_lea.vmem [#allocation5], %s249
        // Predicated region
        $region37: #{tpu_custom_call.1} parent=31 // pred_check
          %p251 = pneg %p93
        $region38: #{tpu_custom_call.1} parent=31 // pred_check_branch
          %253 = sbr.rel (%p251) target = $region40
        $region39: #{tpu_custom_call.1} parent=31 // pred_region
          %254 = dma.done %s247, 8192
        $region40: #{tpu_custom_call.1} parent=31 // pred_fallthru
          _
        %s255 = sand.u32 %s23, 1
        %s256 = scalar_lea.sflag [#allocation6], %s255
        %s257 = sand.u32 %s106, 1
        %s258 = scalar_lea.vmem [#allocation7], %s257
        // Predicated region
        $region41: #{tpu_custom_call.1} parent=31 // pred_check
          %p259 = pneg %p119
        $region42: #{tpu_custom_call.1} parent=31 // pred_check_branch
          %261 = sbr.rel (%p259) target = $region44
        $region43: #{tpu_custom_call.1} parent=31 // pred_region
          %262 = dma.done %s256, 16
        $region44: #{tpu_custom_call.1} parent=31 // pred_fallthru
          _
        %s263 = sand.u32 %s52, 1
        %s264 = scalar_lea.sflag [#allocation3], %s263
        %s265 = sand.u32 %s52, 1
        %s266 = smul.addr %s265, 1024
        %s267 = scalar_lea.vmem [#allocation2], %s266
        %p268 = pneg %p65
        %p269 = pneg %p62
        %s270 = sand.u32 %s23, 1
        %s271 = scalar_lea.sflag [#allocation6], %s270
        %s272 = sand.u32 %s80, 1
        %s273 = smul.addr %s272, 512
        %s274 = scalar_lea.vmem [#allocation5], %s273
        %p275 = pneg %p93
        %p276 = pneg %p90
        %s277 = sand.u32 %s23, 1
        %s278 = scalar_lea.sflag [#allocation6], %s277
        %s279 = sand.u32 %s106, 1
        %s280 = scalar_lea.vmem [#allocation7], %s279
        %p281 = pneg %p119
        %p282 = pneg %p116
        %p283 = pneg %p147
        %p284 = pneg %p144
        %s285 = sand.u32 %s134, 1
        %s286 = scalar_lea.sflag [#allocation4], %s285
        %s287 = sand.u32 %s134, 1
        %s288 = smul.addr %s287, 256
        %s289 = scalar_lea.vmem [#allocation8], %s288
        %s290 = smul.u32 32, %s28
        %s291 = smul.u32 4, %s30
        %s292 = smul.u32 64, %s30
        %s293 = smul.u32 32, %s28
        %p294 = scmp.eq.s32.totalorder %s30, 0
        // Predicated region
        $region45: #{tpu_custom_call.1} parent=31 // pred_check
          %p295 = pneg %p294
        $region46: #{tpu_custom_call.1} parent=31 // pred_check_branch
          %297 = sbr.rel (%p295) target = $region48
        $region47: #{tpu_custom_call.1} parent=31 // pred_region
          %v298 = vld [vmem:[%s258] sm:$0x1]
          %v300 = vlaneseq
          %v301 = vshrl.u32 %v300, 7
          %v302 = vsub.s32 0, %v301
          %v303 = vrot.slane %v298, %v302
          %305 = vst [vmem:[%s289] sm:$0xff] %v303
          %306 = vst [vmem:[%s289 + $0x8] sm:$0xff] %v303
          %307 = vst [vmem:[%s289 + $0x10] sm:$0xff] %v303
          %308 = vst [vmem:[%s289 + $0x18] sm:$0xff] %v303
          %309 = vst [vmem:[%s289 + $0x20] sm:$0xff] %v303
          %310 = vst [vmem:[%s289 + $0x28] sm:$0xff] %v303
          %311 = vst [vmem:[%s289 + $0x30] sm:$0xff] %v303
          %312 = vst [vmem:[%s289 + $0x38] sm:$0xff] %v303
          %313 = vst [vmem:[%s289 + $0x40] sm:$0xff] %v303
          %314 = vst [vmem:[%s289 + $0x48] sm:$0xff] %v303
          %315 = vst [vmem:[%s289 + $0x50] sm:$0xff] %v303
          %316 = vst [vmem:[%s289 + $0x58] sm:$0xff] %v303
          %317 = vst [vmem:[%s289 + $0x60] sm:$0xff] %v303
          %318 = vst [vmem:[%s289 + $0x68] sm:$0xff] %v303
          %319 = vst [vmem:[%s289 + $0x70] sm:$0xff] %v303
          %320 = vst [vmem:[%s289 + $0x78] sm:$0xff] %v303
          %321 = vst [vmem:[%s289 + $0x80] sm:$0xff] %v303
          %322 = vst [vmem:[%s289 + $0x88] sm:$0xff] %v303
          %323 = vst [vmem:[%s289 + $0x90] sm:$0xff] %v303
          %324 = vst [vmem:[%s289 + $0x98] sm:$0xff] %v303
          %325 = vst [vmem:[%s289 + $0xa0] sm:$0xff] %v303
          %326 = vst [vmem:[%s289 + $0xa8] sm:$0xff] %v303
          %327 = vst [vmem:[%s289 + $0xb0] sm:$0xff] %v303
          %328 = vst [vmem:[%s289 + $0xb8] sm:$0xff] %v303
          %329 = vst [vmem:[%s289 + $0xc0] sm:$0xff] %v303
          %330 = vst [vmem:[%s289 + $0xc8] sm:$0xff] %v303
          %331 = vst [vmem:[%s289 + $0xd0] sm:$0xff] %v303
          %332 = vst [vmem:[%s289 + $0xd8] sm:$0xff] %v303
          %333 = vst [vmem:[%s289 + $0xe0] sm:$0xff] %v303
          %334 = vst [vmem:[%s289 + $0xe8] sm:$0xff] %v303
          %335 = vst [vmem:[%s289 + $0xf0] sm:$0xff] %v303
          %336 = vst [vmem:[%s289 + $0xf8] sm:$0xff] %v303
        $region48: #{tpu_custom_call.1} parent=31 // pred_fallthru
          _
        %v337 = vld [vmem:[%s289] sm:$0xff]
        %v338 = vld [vmem:[%s289 + $0x8] sm:$0xff]
        %v339 = vld [vmem:[%s289 + $0x10] sm:$0xff]
        %v340 = vld [vmem:[%s289 + $0x18] sm:$0xff]
        %v341 = vld [vmem:[%s289 + $0x20] sm:$0xff]
        %v342 = vld [vmem:[%s289 + $0x28] sm:$0xff]
        %v343 = vld [vmem:[%s289 + $0x30] sm:$0xff]
        %v344 = vld [vmem:[%s289 + $0x38] sm:$0xff]
        %v345 = vld [vmem:[%s289 + $0x40] sm:$0xff]
        %v346 = vld [vmem:[%s289 + $0x48] sm:$0xff]
        %v347 = vld [vmem:[%s289 + $0x50] sm:$0xff]
        %v348 = vld [vmem:[%s289 + $0x58] sm:$0xff]
        %v349 = vld [vmem:[%s289 + $0x60] sm:$0xff]
        %v350 = vld [vmem:[%s289 + $0x68] sm:$0xff]
        %v351 = vld [vmem:[%s289 + $0x70] sm:$0xff]
        %v352 = vld [vmem:[%s289 + $0x78] sm:$0xff]
        %v353 = vld [vmem:[%s289 + $0x80] sm:$0xff]
        %v354 = vld [vmem:[%s289 + $0x88] sm:$0xff]
        %v355 = vld [vmem:[%s289 + $0x90] sm:$0xff]
        %v356 = vld [vmem:[%s289 + $0x98] sm:$0xff]
        %v357 = vld [vmem:[%s289 + $0xa0] sm:$0xff]
        %v358 = vld [vmem:[%s289 + $0xa8] sm:$0xff]
        %v359 = vld [vmem:[%s289 + $0xb0] sm:$0xff]
        %v360 = vld [vmem:[%s289 + $0xb8] sm:$0xff]
        %v361 = vld [vmem:[%s289 + $0xc0] sm:$0xff]
        %v362 = vld [vmem:[%s289 + $0xc8] sm:$0xff]
        %v363 = vld [vmem:[%s289 + $0xd0] sm:$0xff]
        %v364 = vld [vmem:[%s289 + $0xd8] sm:$0xff]
        %v365 = vld [vmem:[%s289 + $0xe0] sm:$0xff]
        %v366 = vld [vmem:[%s289 + $0xe8] sm:$0xff]
        %v367 = vld [vmem:[%s289 + $0xf0] sm:$0xff]
        %v368 = vld [vmem:[%s289 + $0xf8] sm:$0xff]
        %v369 = vld [vmem:[%s241] sm:$0xff]
        %v370 = vld [vmem:[%s241 + $0x8] sm:$0xff]
        %v371 = vld [vmem:[%s241 + $0x10] sm:$0xff]
        %v372 = vld [vmem:[%s241 + $0x18] sm:$0xff]
        %v373 = vld [vmem:[%s241 + $0x20] sm:$0xff]
        %v374 = vld [vmem:[%s241 + $0x28] sm:$0xff]
        %v375 = vld [vmem:[%s241 + $0x30] sm:$0xff]
        %v376 = vld [vmem:[%s241 + $0x38] sm:$0xff]
        %v377 = vld [vmem:[%s241 + $0x40] sm:$0xff]
        %v378 = vld [vmem:[%s241 + $0x48] sm:$0xff]
        %v379 = vld [vmem:[%s241 + $0x50] sm:$0xff]
        %v380 = vld [vmem:[%s241 + $0x58] sm:$0xff]
        %v381 = vld [vmem:[%s241 + $0x60] sm:$0xff]
        %v382 = vld [vmem:[%s241 + $0x68] sm:$0xff]
        %v383 = vld [vmem:[%s241 + $0x70] sm:$0xff]
        %v384 = vld [vmem:[%s241 + $0x78] sm:$0xff]
        %v385 = vld [vmem:[%s241 + $0x80] sm:$0xff]
        %v386 = vld [vmem:[%s241 + $0x88] sm:$0xff]
        %v387 = vld [vmem:[%s241 + $0x90] sm:$0xff]
        %v388 = vld [vmem:[%s241 + $0x98] sm:$0xff]
        %v389 = vld [vmem:[%s241 + $0xa0] sm:$0xff]
        %v390 = vld [vmem:[%s241 + $0xa8] sm:$0xff]
        %v391 = vld [vmem:[%s241 + $0xb0] sm:$0xff]
        %v392 = vld [vmem:[%s241 + $0xb8] sm:$0xff]
        %v393 = vld [vmem:[%s241 + $0xc0] sm:$0xff]
        %v394 = vld [vmem:[%s241 + $0xc8] sm:$0xff]
        %v395 = vld [vmem:[%s241 + $0xd0] sm:$0xff]
        %v396 = vld [vmem:[%s241 + $0xd8] sm:$0xff]
        %v397 = vld [vmem:[%s241 + $0xe0] sm:$0xff]
        %v398 = vld [vmem:[%s241 + $0xe8] sm:$0xff]
        %v399 = vld [vmem:[%s241 + $0xf0] sm:$0xff]
        %v400 = vld [vmem:[%s241 + $0xf8] sm:$0xff]
        %v401 = vld [vmem:[%s241 + $0x100] sm:$0xff]
        %v402 = vld [vmem:[%s241 + $0x108] sm:$0xff]
        %v403 = vld [vmem:[%s241 + $0x110] sm:$0xff]
        %v404 = vld [vmem:[%s241 + $0x118] sm:$0xff]
        %v405 = vld [vmem:[%s241 + $0x120] sm:$0xff]
        %v406 = vld [vmem:[%s241 + $0x128] sm:$0xff]
        %v407 = vld [vmem:[%s241 + $0x130] sm:$0xff]
        %v408 = vld [vmem:[%s241 + $0x138] sm:$0xff]
        %v409 = vld [vmem:[%s241 + $0x140] sm:$0xff]
        %v410 = vld [vmem:[%s241 + $0x148] sm:$0xff]
        %v411 = vld [vmem:[%s241 + $0x150] sm:$0xff]
        %v412 = vld [vmem:[%s241 + $0x158] sm:$0xff]
        %v413 = vld [vmem:[%s241 + $0x160] sm:$0xff]
        %v414 = vld [vmem:[%s241 + $0x168] sm:$0xff]
        %v415 = vld [vmem:[%s241 + $0x170] sm:$0xff]
        %v416 = vld [vmem:[%s241 + $0x178] sm:$0xff]
        %v417 = vld [vmem:[%s241 + $0x180] sm:$0xff]
        %v418 = vld [vmem:[%s241 + $0x188] sm:$0xff]
        %v419 = vld [vmem:[%s241 + $0x190] sm:$0xff]
        %v420 = vld [vmem:[%s241 + $0x198] sm:$0xff]
        %v421 = vld [vmem:[%s241 + $0x1a0] sm:$0xff]
        %v422 = vld [vmem:[%s241 + $0x1a8] sm:$0xff]
        %v423 = vld [vmem:[%s241 + $0x1b0] sm:$0xff]
        %v424 = vld [vmem:[%s241 + $0x1b8] sm:$0xff]
        %v425 = vld [vmem:[%s241 + $0x1c0] sm:$0xff]
        %v426 = vld [vmem:[%s241 + $0x1c8] sm:$0xff]
        %v427 = vld [vmem:[%s241 + $0x1d0] sm:$0xff]
        %v428 = vld [vmem:[%s241 + $0x1d8] sm:$0xff]
        %v429 = vld [vmem:[%s241 + $0x1e0] sm:$0xff]
        %v430 = vld [vmem:[%s241 + $0x1e8] sm:$0xff]
        %v431 = vld [vmem:[%s241 + $0x1f0] sm:$0xff]
        %v432 = vld [vmem:[%s241 + $0x1f8] sm:$0xff]
        %v433 = vld [vmem:[%s241 + $0x200] sm:$0xff]
        %v434 = vld [vmem:[%s241 + $0x208] sm:$0xff]
        %v435 = vld [vmem:[%s241 + $0x210] sm:$0xff]
        %v436 = vld [vmem:[%s241 + $0x218] sm:$0xff]
        %v437 = vld [vmem:[%s241 + $0x220] sm:$0xff]
        %v438 = vld [vmem:[%s241 + $0x228] sm:$0xff]
        %v439 = vld [vmem:[%s241 + $0x230] sm:$0xff]
        %v440 = vld [vmem:[%s241 + $0x238] sm:$0xff]
        %v441 = vld [vmem:[%s241 + $0x240] sm:$0xff]
        %v442 = vld [vmem:[%s241 + $0x248] sm:$0xff]
        %v443 = vld [vmem:[%s241 + $0x250] sm:$0xff]
        %v444 = vld [vmem:[%s241 + $0x258] sm:$0xff]
        %v445 = vld [vmem:[%s241 + $0x260] sm:$0xff]
        %v446 = vld [vmem:[%s241 + $0x268] sm:$0xff]
        %v447 = vld [vmem:[%s241 + $0x270] sm:$0xff]
        %v448 = vld [vmem:[%s241 + $0x278] sm:$0xff]
        %v449 = vld [vmem:[%s241 + $0x280] sm:$0xff]
        %v450 = vld [vmem:[%s241 + $0x288] sm:$0xff]
        %v451 = vld [vmem:[%s241 + $0x290] sm:$0xff]
        %v452 = vld [vmem:[%s241 + $0x298] sm:$0xff]
        %v453 = vld [vmem:[%s241 + $0x2a0] sm:$0xff]
        %v454 = vld [vmem:[%s241 + $0x2a8] sm:$0xff]
        %v455 = vld [vmem:[%s241 + $0x2b0] sm:$0xff]
        %v456 = vld [vmem:[%s241 + $0x2b8] sm:$0xff]
        %v457 = vld [vmem:[%s241 + $0x2c0] sm:$0xff]
        %v458 = vld [vmem:[%s241 + $0x2c8] sm:$0xff]
        %v459 = vld [vmem:[%s241 + $0x2d0] sm:$0xff]
        %v460 = vld [vmem:[%s241 + $0x2d8] sm:$0xff]
        %v461 = vld [vmem:[%s241 + $0x2e0] sm:$0xff]
        %v462 = vld [vmem:[%s241 + $0x2e8] sm:$0xff]
        %v463 = vld [vmem:[%s241 + $0x2f0] sm:$0xff]
        %v464 = vld [vmem:[%s241 + $0x2f8] sm:$0xff]
        %v465 = vld [vmem:[%s241 + $0x300] sm:$0xff]
        %v466 = vld [vmem:[%s241 + $0x308] sm:$0xff]
        %v467 = vld [vmem:[%s241 + $0x310] sm:$0xff]
        %v468 = vld [vmem:[%s241 + $0x318] sm:$0xff]
        %v469 = vld [vmem:[%s241 + $0x320] sm:$0xff]
        %v470 = vld [vmem:[%s241 + $0x328] sm:$0xff]
        %v471 = vld [vmem:[%s241 + $0x330] sm:$0xff]
        %v472 = vld [vmem:[%s241 + $0x338] sm:$0xff]
        %v473 = vld [vmem:[%s241 + $0x340] sm:$0xff]
        %v474 = vld [vmem:[%s241 + $0x348] sm:$0xff]
        %v475 = vld [vmem:[%s241 + $0x350] sm:$0xff]
        %v476 = vld [vmem:[%s241 + $0x358] sm:$0xff]
        %v477 = vld [vmem:[%s241 + $0x360] sm:$0xff]
        %v478 = vld [vmem:[%s241 + $0x368] sm:$0xff]
        %v479 = vld [vmem:[%s241 + $0x370] sm:$0xff]
        %v480 = vld [vmem:[%s241 + $0x378] sm:$0xff]
        %v481 = vld [vmem:[%s241 + $0x380] sm:$0xff]
        %v482 = vld [vmem:[%s241 + $0x388] sm:$0xff]
        %v483 = vld [vmem:[%s241 + $0x390] sm:$0xff]
        %v484 = vld [vmem:[%s241 + $0x398] sm:$0xff]
        %v485 = vld [vmem:[%s241 + $0x3a0] sm:$0xff]
        %v486 = vld [vmem:[%s241 + $0x3a8] sm:$0xff]
        %v487 = vld [vmem:[%s241 + $0x3b0] sm:$0xff]
        %v488 = vld [vmem:[%s241 + $0x3b8] sm:$0xff]
        %v489 = vld [vmem:[%s241 + $0x3c0] sm:$0xff]
        %v490 = vld [vmem:[%s241 + $0x3c8] sm:$0xff]
        %v491 = vld [vmem:[%s241 + $0x3d0] sm:$0xff]
        %v492 = vld [vmem:[%s241 + $0x3d8] sm:$0xff]
        %v493 = vld [vmem:[%s241 + $0x3e0] sm:$0xff]
        %v494 = vld [vmem:[%s241 + $0x3e8] sm:$0xff]
        %v495 = vld [vmem:[%s241 + $0x3f0] sm:$0xff]
        %v496 = vld [vmem:[%s241 + $0x3f8] sm:$0xff]
        %v497 = vld [vmem:[%s250] sm:$0xff]
        %v498 = vld [vmem:[%s250 + $0x8] sm:$0xff]
        %v499 = vld [vmem:[%s250 + $0x10] sm:$0xff]
        %v500 = vld [vmem:[%s250 + $0x18] sm:$0xff]
        %v501 = vld [vmem:[%s250 + $0x20] sm:$0xff]
        %v502 = vld [vmem:[%s250 + $0x28] sm:$0xff]
        %v503 = vld [vmem:[%s250 + $0x30] sm:$0xff]
        %v504 = vld [vmem:[%s250 + $0x38] sm:$0xff]
        %v505 = vld [vmem:[%s250 + $0x40] sm:$0xff]
        %v506 = vld [vmem:[%s250 + $0x48] sm:$0xff]
        %v507 = vld [vmem:[%s250 + $0x50] sm:$0xff]
        %v508 = vld [vmem:[%s250 + $0x58] sm:$0xff]
        %v509 = vld [vmem:[%s250 + $0x60] sm:$0xff]
        %v510 = vld [vmem:[%s250 + $0x68] sm:$0xff]
        %v511 = vld [vmem:[%s250 + $0x70] sm:$0xff]
        %v512 = vld [vmem:[%s250 + $0x78] sm:$0xff]
        %v513 = vld [vmem:[%s250 + $0x80] sm:$0xff]
        %v514 = vld [vmem:[%s250 + $0x88] sm:$0xff]
        %v515 = vld [vmem:[%s250 + $0x90] sm:$0xff]
        %v516 = vld [vmem:[%s250 + $0x98] sm:$0xff]
        %v517 = vld [vmem:[%s250 + $0xa0] sm:$0xff]
        %v518 = vld [vmem:[%s250 + $0xa8] sm:$0xff]
        %v519 = vld [vmem:[%s250 + $0xb0] sm:$0xff]
        %v520 = vld [vmem:[%s250 + $0xb8] sm:$0xff]
        %v521 = vld [vmem:[%s250 + $0xc0] sm:$0xff]
        %v522 = vld [vmem:[%s250 + $0xc8] sm:$0xff]
        %v523 = vld [vmem:[%s250 + $0xd0] sm:$0xff]
        %v524 = vld [vmem:[%s250 + $0xd8] sm:$0xff]
        %v525 = vld [vmem:[%s250 + $0xe0] sm:$0xff]
        %v526 = vld [vmem:[%s250 + $0xe8] sm:$0xff]
        %v527 = vld [vmem:[%s250 + $0xf0] sm:$0xff]
        %v528 = vld [vmem:[%s250 + $0xf8] sm:$0xff]
        %v529 = vld [vmem:[%s250 + $0x100] sm:$0xff]
        %v530 = vld [vmem:[%s250 + $0x108] sm:$0xff]
        %v531 = vld [vmem:[%s250 + $0x110] sm:$0xff]
        %v532 = vld [vmem:[%s250 + $0x118] sm:$0xff]
        %v533 = vld [vmem:[%s250 + $0x120] sm:$0xff]
        %v534 = vld [vmem:[%s250 + $0x128] sm:$0xff]
        %v535 = vld [vmem:[%s250 + $0x130] sm:$0xff]
        %v536 = vld [vmem:[%s250 + $0x138] sm:$0xff]
        %v537 = vld [vmem:[%s250 + $0x140] sm:$0xff]
        %v538 = vld [vmem:[%s250 + $0x148] sm:$0xff]
        %v539 = vld [vmem:[%s250 + $0x150] sm:$0xff]
        %v540 = vld [vmem:[%s250 + $0x158] sm:$0xff]
        %v541 = vld [vmem:[%s250 + $0x160] sm:$0xff]
        %v542 = vld [vmem:[%s250 + $0x168] sm:$0xff]
        %v543 = vld [vmem:[%s250 + $0x170] sm:$0xff]
        %v544 = vld [vmem:[%s250 + $0x178] sm:$0xff]
        %v545 = vld [vmem:[%s250 + $0x180] sm:$0xff]
        %v546 = vld [vmem:[%s250 + $0x188] sm:$0xff]
        %v547 = vld [vmem:[%s250 + $0x190] sm:$0xff]
        %v548 = vld [vmem:[%s250 + $0x198] sm:$0xff]
        %v549 = vld [vmem:[%s250 + $0x1a0] sm:$0xff]
        %v550 = vld [vmem:[%s250 + $0x1a8] sm:$0xff]
        %v551 = vld [vmem:[%s250 + $0x1b0] sm:$0xff]
        %v552 = vld [vmem:[%s250 + $0x1b8] sm:$0xff]
        %v553 = vld [vmem:[%s250 + $0x1c0] sm:$0xff]
        %v554 = vld [vmem:[%s250 + $0x1c8] sm:$0xff]
        %v555 = vld [vmem:[%s250 + $0x1d0] sm:$0xff]
        %v556 = vld [vmem:[%s250 + $0x1d8] sm:$0xff]
        %v557 = vld [vmem:[%s250 + $0x1e0] sm:$0xff]
        %v558 = vld [vmem:[%s250 + $0x1e8] sm:$0xff]
        %v559 = vld [vmem:[%s250 + $0x1f0] sm:$0xff]
        %v560 = vld [vmem:[%s250 + $0x1f8] sm:$0xff]
        %561 = vmatprep.subr.mxu0 0.0
        %562 = vmatpush1.msra.mxu0 %v497
        %563 = vmatprep.subr.mxu0 0.0
        %564 = vmatpush1.msra.mxu0 %v498
        %565 = vmatprep.subr.mxu0 0.0
        %566 = vmatpush1.msra.mxu0 %v499
        %567 = vmatprep.subr.mxu0 0.0
        %568 = vmatpush1.msra.mxu0 %v500
        %569 = vmatprep.subr.mxu0 0.0
        %570 = vmatpush1.msra.mxu0 %v501
        %571 = vmatprep.subr.mxu0 0.0
        %572 = vmatpush1.msra.mxu0 %v502
        %573 = vmatprep.subr.mxu0 0.0
        %574 = vmatpush1.msra.mxu0 %v503
        %575 = vmatprep.subr.mxu0 0.0
        %576 = vmatpush1.msra.mxu0 %v504
        %577 = vmatprep.subr.mxu0 0.0
        %578 = vmatpush1.msra.mxu0 %v505
        %579 = vmatprep.subr.mxu0 0.0
        %580 = vmatpush1.msra.mxu0 %v506
        %581 = vmatprep.subr.mxu0 0.0
        %582 = vmatpush1.msra.mxu0 %v507
        %583 = vmatprep.subr.mxu0 0.0
        %584 = vmatpush1.msra.mxu0 %v508
        %585 = vmatprep.subr.mxu0 0.0
        %586 = vmatpush1.msra.mxu0 %v509
        %587 = vmatprep.subr.mxu0 0.0
        %588 = vmatpush1.msra.mxu0 %v510
        %589 = vmatprep.subr.mxu0 0.0
        %590 = vmatpush1.msra.mxu0 %v511
        %591 = vmatprep.subr.mxu0 0.0
        %592 = vmatpush1.msra.mxu0 %v512
        %593 = vmatprep.subr.mxu0 0.0
        %594 = vmatpush1.msra.mxu0 %v513
        %595 = vmatprep.subr.mxu0 0.0
        %596 = vmatpush1.msra.mxu0 %v514
        %597 = vmatprep.subr.mxu0 0.0
        %598 = vmatpush1.msra.mxu0 %v515
        %599 = vmatprep.subr.mxu0 0.0
        %600 = vmatpush1.msra.mxu0 %v516
        %601 = vmatprep.subr.mxu0 0.0
        %602 = vmatpush1.msra.mxu0 %v517
        %603 = vmatprep.subr.mxu0 0.0
        %604 = vmatpush1.msra.mxu0 %v518
        %605 = vmatprep.subr.mxu0 0.0
        %606 = vmatpush1.msra.mxu0 %v519
        %607 = vmatprep.subr.mxu0 0.0
        %608 = vmatpush1.msra.mxu0 %v520
        %609 = vmatprep.subr.mxu0 0.0
        %610 = vmatpush1.msra.mxu0 %v521
        %611 = vmatprep.subr.mxu0 0.0
        %612 = vmatpush1.msra.mxu0 %v522
        %613 = vmatprep.subr.mxu0 0.0
        %614 = vmatpush1.msra.mxu0 %v523
        %615 = vmatprep.subr.mxu0 0.0
        %616 = vmatpush1.msra.mxu0 %v524
        %617 = vmatprep.subr.mxu0 0.0
        %618 = vmatpush1.msra.mxu0 %v525
        %619 = vmatprep.subr.mxu0 0.0
        %620 = vmatpush1.msra.mxu0 %v526
        %621 = vmatprep.subr.mxu0 0.0
        %622 = vmatpush1.msra.mxu0 %v527
        %623 = vmatprep.subr.mxu0 0.0
        %624 = vmatpush1.msra.mxu0 %v528
        %625 = vmatprep.mubr.f32.mxu0 %v370
        %626 = vmatmul.mubr.f32.gmra.mrb[0].mxu0 %v369
        %v627 = vpop.f32.mrb[0].mxu0
        %v628 = vadd.f32 0.0, %v627
        %v629 = vpop.f32.mrb[0].mxu0
        %630 = vmatprep.mubr.f32.mxu0 %v374
        %631 = vmatmul.mubr.f32.gmra.mrb[0].mxu0 %v373
        %v632 = vpop.f32.mrb[0].mxu0
        %v633 = vadd.f32 0.0, %v632
        %v634 = vpop.f32.mrb[0].mxu0
        %635 = vmatprep.mubr.f32.mxu0 %v378
        %636 = vmatmul.mubr.f32.gmra.mrb[0].mxu0 %v377
        %v637 = vpop.f32.mrb[0].mxu0
        %v638 = vadd.f32 0.0, %v637
        %v639 = vpop.f32.mrb[0].mxu0
        %640 = vmatprep.mubr.f32.mxu0 %v382
        %641 = vmatmul.mubr.f32.gmra.mrb[0].mxu0 %v381
        %v642 = vpop.f32.mrb[0].mxu0
        %v643 = vadd.f32 0.0, %v642
        %v644 = vpop.f32.mrb[0].mxu0
        %645 = vmatprep.mubr.f32.mxu0 %v386
        %646 = vmatmul.mubr.f32.gmra.mrb[0].mxu0 %v385
        %v647 = vpop.f32.mrb[0].mxu0
        %v648 = vadd.f32 0.0, %v647
        %v649 = vpop.f32.mrb[0].mxu0
        %650 = vmatprep.mubr.f32.mxu0 %v390
        %651 = vmatmul.mubr.f32.gmra.mrb[0].mxu0 %v389
        %v652 = vpop.f32.mrb[0].mxu0
        %v653 = vadd.f32 0.0, %v652
        %v654 = vpop.f32.mrb[0].mxu0
        %655 = vmatprep.mubr.f32.mxu0 %v394
        %656 = vmatmul.mubr.f32.gmra.mrb[0].mxu0 %v393
        %v657 = vpop.f32.mrb[0].mxu0
        %v658 = vadd.f32 0.0, %v657
        %v659 = vpop.f32.mrb[0].mxu0
        %660 = vmatprep.mubr.f32.mxu0 %v398
        %661 = vmatmul.mubr.f32.gmra.mrb[0].mxu0 %v397
        %v662 = vpop.f32.mrb[0].mxu0
        %v663 = vadd.f32 0.0, %v662
        %v664 = vpop.f32.mrb[0].mxu0
        %665 = vmatprep.mubr.f32.mxu0 %v402
        %666 = vmatmul.mubr.f32.gmra.mrb[0].mxu0 %v401
        %v667 = vpop.f32.mrb[0].mxu0
        %v668 = vadd.f32 0.0, %v667
        %v669 = vpop.f32.mrb[0].mxu0
        %670 = vmatprep.mubr.f32.mxu0 %v406
        %671 = vmatmul.mubr.f32.gmra.mrb[0].mxu0 %v405
        %v672 = vpop.f32.mrb[0].mxu0
        %v673 = vadd.f32 0.0, %v672
        %v674 = vpop.f32.mrb[0].mxu0
        %675 = vmatprep.mubr.f32.mxu0 %v410
        %676 = vmatmul.mubr.f32.gmra.mrb[0].mxu0 %v409
        %v677 = vpop.f32.mrb[0].mxu0
        %v678 = vadd.f32 0.0, %v677
        %v679 = vpop.f32.mrb[0].mxu0
        %680 = vmatprep.mubr.f32.mxu0 %v414
        %681 = vmatmul.mubr.f32.gmra.mrb[0].mxu0 %v413
        %v682 = vpop.f32.mrb[0].mxu0
        %v683 = vadd.f32 0.0, %v682
        %v684 = vpop.f32.mrb[0].mxu0
        %685 = vmatprep.mubr.f32.mxu0 %v418
        %686 = vmatmul.mubr.f32.gmra.mrb[0].mxu0 %v417
        %v687 = vpop.f32.mrb[0].mxu0
        %v688 = vadd.f32 0.0, %v687
        %v689 = vpop.f32.mrb[0].mxu0
        %690 = vmatprep.mubr.f32.mxu0 %v422
        %691 = vmatmul.mubr.f32.gmra.mrb[0].mxu0 %v421
        %v692 = vpop.f32.mrb[0].mxu0
        %v693 = vadd.f32 0.0, %v692
        %v694 = vpop.f32.mrb[0].mxu0
        %695 = vmatprep.mubr.f32.mxu0 %v426
        %696 = vmatmul.mubr.f32.gmra.mrb[0].mxu0 %v425
        %v697 = vpop.f32.mrb[0].mxu0
        %v698 = vadd.f32 0.0, %v697
        %v699 = vpop.f32.mrb[0].mxu0
        %700 = vmatprep.mubr.f32.mxu0 %v430
        %701 = vmatmul.mubr.f32.gmra.mrb[0].mxu0 %v429
        %v702 = vpop.f32.mrb[0].mxu0
        %v703 = vadd.f32 0.0, %v702
        %v704 = vpop.f32.mrb[0].mxu0
        %705 = vmatprep.mubr.f32.mxu0 %v434
        %706 = vmatmul.mubr.f32.gmra.mrb[0].mxu0 %v433
        %v707 = vpop.f32.mrb[0].mxu0
        %v708 = vadd.f32 0.0, %v707
        %v709 = vpop.f32.mrb[0].mxu0
        %710 = vmatprep.mubr.f32.mxu0 %v438
        %711 = vmatmul.mubr.f32.gmra.mrb[0].mxu0 %v437
        %v712 = vpop.f32.mrb[0].mxu0
        %v713 = vadd.f32 0.0, %v712
        %v714 = vpop.f32.mrb[0].mxu0
        %715 = vmatprep.mubr.f32.mxu0 %v442
        %716 = vmatmul.mubr.f32.gmra.mrb[0].mxu0 %v441
        %v717 = vpop.f32.mrb[0].mxu0
        %v718 = vadd.f32 0.0, %v717
        %v719 = vpop.f32.mrb[0].mxu0
        %720 = vmatprep.mubr.f32.mxu0 %v446
        %721 = vmatmul.mubr.f32.gmra.mrb[0].mxu0 %v445
        %v722 = vpop.f32.mrb[0].mxu0
        %v723 = vadd.f32 0.0, %v722
        %v724 = vpop.f32.mrb[0].mxu0
        %725 = vmatprep.mubr.f32.mxu0 %v450
        %726 = vmatmul.mubr.f32.gmra.mrb[0].mxu0 %v449
        %v727 = vpop.f32.mrb[0].mxu0
        %v728 = vadd.f32 0.0, %v727
        %v729 = vpop.f32.mrb[0].mxu0
        %730 = vmatprep.mubr.f32.mxu0 %v454
        %731 = vmatmul.mubr.f32.gmra.mrb[0].mxu0 %v453
        %v732 = vpop.f32.mrb[0].mxu0
        %v733 = vadd.f32 0.0, %v732
        %v734 = vpop.f32.mrb[0].mxu0
        %735 = vmatprep.mubr.f32.mxu0 %v458
        %736 = vmatmul.mubr.f32.gmra.mrb[0].mxu0 %v457
        %v737 = vpop.f32.mrb[0].mxu0
        %v738 = vadd.f32 0.0, %v737
        %v739 = vpop.f32.mrb[0].mxu0
        %740 = vmatprep.mubr.f32.mxu0 %v462
        %741 = vmatmul.mubr.f32.gmra.mrb[0].mxu0 %v461
        %v742 = vpop.f32.mrb[0].mxu0
        %v743 = vadd.f32 0.0, %v742
        %v744 = vpop.f32.mrb[0].mxu0
        %745 = vmatprep.mubr.f32.mxu0 %v466
        %746 = vmatmul.mubr.f32.gmra.mrb[0].mxu0 %v465
        %v747 = vpop.f32.mrb[0].mxu0
        %v748 = vadd.f32 0.0, %v747
        %v749 = vpop.f32.mrb[0].mxu0
        %750 = vmatprep.mubr.f32.mxu0 %v470
        %751 = vmatmul.mubr.f32.gmra.mrb[0].mxu0 %v469
        %v752 = vpop.f32.mrb[0].mxu0
        %v753 = vadd.f32 0.0, %v752
        %v754 = vpop.f32.mrb[0].mxu0
        %755 = vmatprep.mubr.f32.mxu0 %v474
        %756 = vmatmul.mubr.f32.gmra.mrb[0].mxu0 %v473
        %v757 = vpop.f32.mrb[0].mxu0
        %v758 = vadd.f32 0.0, %v757
        %v759 = vpop.f32.mrb[0].mxu0
        %760 = vmatprep.mubr.f32.mxu0 %v478
        %761 = vmatmul.mubr.f32.gmra.mrb[0].mxu0 %v477
        %v762 = vpop.f32.mrb[0].mxu0
        %v763 = vadd.f32 0.0, %v762
        %v764 = vpop.f32.mrb[0].mxu0
        %765 = vmatprep.mubr.f32.mxu0 %v482
        %766 = vmatmul.mubr.f32.gmra.mrb[0].mxu0 %v481
        %v767 = vpop.f32.mrb[0].mxu0
        %v768 = vadd.f32 0.0, %v767
        %v769 = vpop.f32.mrb[0].mxu0
        %770 = vmatprep.mubr.f32.mxu0 %v486
        %771 = vmatmul.mubr.f32.gmra.mrb[0].mxu0 %v485
        %v772 = vpop.f32.mrb[0].mxu0
        %v773 = vadd.f32 0.0, %v772
        %v774 = vpop.f32.mrb[0].mxu0
        %775 = vmatprep.mubr.f32.mxu0 %v490
        %776 = vmatmul.mubr.f32.gmra.mrb[0].mxu0 %v489
        %v777 = vpop.f32.mrb[0].mxu0
        %v778 = vadd.f32 0.0, %v777
        %v779 = vpop.f32.mrb[0].mxu0
        %780 = vmatprep.mubr.f32.mxu0 %v494
        %781 = vmatmul.mubr.f32.gmra.mrb[0].mxu0 %v493
        %v782 = vpop.f32.mrb[0].mxu0
        %v783 = vadd.f32 0.0, %v782
        %v784 = vpop.f32.mrb[0].mxu0
        %785 = vdwg.mxu0
        %786 = vmatprep.subr.mxu0 0.0
        %787 = vmatpush1.msra.mxu0 %v529
        %788 = vmatprep.subr.mxu0 0.0
        %789 = vmatpush1.msra.mxu0 %v530
        %790 = vmatprep.subr.mxu0 0.0
        %791 = vmatpush1.msra.mxu0 %v531
        %792 = vmatprep.subr.mxu0 0.0
        %793 = vmatpush1.msra.mxu0 %v532
        %794 = vmatprep.subr.mxu0 0.0
        %795 = vmatpush1.msra.mxu0 %v533
        %796 = vmatprep.subr.mxu0 0.0
        %797 = vmatpush1.msra.mxu0 %v534
        %798 = vmatprep.subr.mxu0 0.0
        %799 = vmatpush1.msra.mxu0 %v535
        %800 = vmatprep.subr.mxu0 0.0
        %801 = vmatpush1.msra.mxu0 %v536
        %802 = vmatprep.subr.mxu0 0.0
        %803 = vmatpush1.msra.mxu0 %v537
        %804 = vmatprep.subr.mxu0 0.0
        %805 = vmatpush1.msra.mxu0 %v538
        %806 = vmatprep.subr.mxu0 0.0
        %807 = vmatpush1.msra.mxu0 %v539
        %808 = vmatprep.subr.mxu0 0.0
        %809 = vmatpush1.msra.mxu0 %v540
        %810 = vmatprep.subr.mxu0 0.0
        %811 = vmatpush1.msra.mxu0 %v541
        %812 = vmatprep.subr.mxu0 0.0
        %813 = vmatpush1.msra.mxu0 %v542
        %814 = vmatprep.subr.mxu0 0.0
        %815 = vmatpush1.msra.mxu0 %v543
        %816 = vmatprep.subr.mxu0 0.0
        %817 = vmatpush1.msra.mxu0 %v544
        %818 = vmatprep.subr.mxu0 0.0
        %819 = vmatpush1.msra.mxu0 %v545
        %820 = vmatprep.subr.mxu0 0.0
        %821 = vmatpush1.msra.mxu0 %v546
        %822 = vmatprep.subr.mxu0 0.0
        %823 = vmatpush1.msra.mxu0 %v547
        %824 = vmatprep.subr.mxu0 0.0
        %825 = vmatpush1.msra.mxu0 %v548
        %826 = vmatprep.subr.mxu0 0.0
        %827 = vmatpush1.msra.mxu0 %v549
        %828 = vmatprep.subr.mxu0 0.0
        %829 = vmatpush1.msra.mxu0 %v550
        %830 = vmatprep.subr.mxu0 0.0
        %831 = vmatpush1.msra.mxu0 %v551
        %832 = vmatprep.subr.mxu0 0.0
        %833 = vmatpush1.msra.mxu0 %v552
        %834 = vmatprep.subr.mxu0 0.0
        %835 = vmatpush1.msra.mxu0 %v553
        %836 = vmatprep.subr.mxu0 0.0
        %837 = vmatpush1.msra.mxu0 %v554
        %838 = vmatprep.subr.mxu0 0.0
        %839 = vmatpush1.msra.mxu0 %v555
        %840 = vmatprep.subr.mxu0 0.0
        %841 = vmatpush1.msra.mxu0 %v556
        %842 = vmatprep.subr.mxu0 0.0
        %843 = vmatpush1.msra.mxu0 %v557
        %844 = vmatprep.subr.mxu0 0.0
        %845 = vmatpush1.msra.mxu0 %v558
        %846 = vmatprep.subr.mxu0 0.0
        %847 = vmatpush1.msra.mxu0 %v559
        %848 = vmatprep.subr.mxu0 0.0
        %849 = vmatpush1.msra.mxu0 %v560
        %850 = vmatprep.mubr.f32.mxu0 %v372
        %851 = vmatmul.mubr.f32.gmra.mrb[0].mxu0 %v371
        %v852 = vpop.f32.mrb[0].mxu0
        %v853 = vadd.f32 %v628, %v852
        %v854 = vpop.f32.mrb[0].mxu0
        %855 = vmatprep.mubr.f32.mxu0 %v376
        %856 = vmatmul.mubr.f32.gmra.mrb[0].mxu0 %v375
        %v857 = vpop.f32.mrb[0].mxu0
        %v858 = vadd.f32 %v633, %v857
        %v859 = vpop.f32.mrb[0].mxu0
        %860 = vmatprep.mubr.f32.mxu0 %v380
        %861 = vmatmul.mubr.f32.gmra.mrb[0].mxu0 %v379
        %v862 = vpop.f32.mrb[0].mxu0
        %v863 = vadd.f32 %v638, %v862
        %v864 = vpop.f32.mrb[0].mxu0
        %865 = vmatprep.mubr.f32.mxu0 %v384
        %866 = vmatmul.mubr.f32.gmra.mrb[0].mxu0 %v383
        %v867 = vpop.f32.mrb[0].mxu0
        %v868 = vadd.f32 %v643, %v867
        %v869 = vpop.f32.mrb[0].mxu0
        %870 = vmatprep.mubr.f32.mxu0 %v388
        %871 = vmatmul.mubr.f32.gmra.mrb[0].mxu0 %v387
        %v872 = vpop.f32.mrb[0].mxu0
        %v873 = vadd.f32 %v648, %v872
        %v874 = vpop.f32.mrb[0].mxu0
        %875 = vmatprep.mubr.f32.mxu0 %v392
        %876 = vmatmul.mubr.f32.gmra.mrb[0].mxu0 %v391
        %v877 = vpop.f32.mrb[0].mxu0
        %v878 = vadd.f32 %v653, %v877
        %v879 = vpop.f32.mrb[0].mxu0
        %880 = vmatprep.mubr.f32.mxu0 %v396
        %881 = vmatmul.mubr.f32.gmra.mrb[0].mxu0 %v395
        %v882 = vpop.f32.mrb[0].mxu0
        %v883 = vadd.f32 %v658, %v882
        %v884 = vpop.f32.mrb[0].mxu0
        %885 = vmatprep.mubr.f32.mxu0 %v400
        %886 = vmatmul.mubr.f32.gmra.mrb[0].mxu0 %v399
        %v887 = vpop.f32.mrb[0].mxu0
        %v888 = vadd.f32 %v663, %v887
        %v889 = vpop.f32.mrb[0].mxu0
        %890 = vmatprep.mubr.f32.mxu0 %v404
        %891 = vmatmul.mubr.f32.gmra.mrb[0].mxu0 %v403
        %v892 = vpop.f32.mrb[0].mxu0
        %v893 = vadd.f32 %v668, %v892
        %v894 = vpop.f32.mrb[0].mxu0
        %895 = vmatprep.mubr.f32.mxu0 %v408
        %896 = vmatmul.mubr.f32.gmra.mrb[0].mxu0 %v407
        %v897 = vpop.f32.mrb[0].mxu0
        %v898 = vadd.f32 %v673, %v897
        %v899 = vpop.f32.mrb[0].mxu0
        %900 = vmatprep.mubr.f32.mxu0 %v412
        %901 = vmatmul.mubr.f32.gmra.mrb[0].mxu0 %v411
        %v902 = vpop.f32.mrb[0].mxu0
        %v903 = vadd.f32 %v678, %v902
        %v904 = vpop.f32.mrb[0].mxu0
        %905 = vmatprep.mubr.f32.mxu0 %v416
        %906 = vmatmul.mubr.f32.gmra.mrb[0].mxu0 %v415
        %v907 = vpop.f32.mrb[0].mxu0
        %v908 = vadd.f32 %v683, %v907
        %v909 = vpop.f32.mrb[0].mxu0
        %910 = vmatprep.mubr.f32.mxu0 %v420
        %911 = vmatmul.mubr.f32.gmra.mrb[0].mxu0 %v419
        %v912 = vpop.f32.mrb[0].mxu0
        %v913 = vadd.f32 %v688, %v912
        %v914 = vpop.f32.mrb[0].mxu0
        %915 = vmatprep.mubr.f32.mxu0 %v424
        %916 = vmatmul.mubr.f32.gmra.mrb[0].mxu0 %v423
        %v917 = vpop.f32.mrb[0].mxu0
        %v918 = vadd.f32 %v693, %v917
        %v919 = vpop.f32.mrb[0].mxu0
        %920 = vmatprep.mubr.f32.mxu0 %v428
        %921 = vmatmul.mubr.f32.gmra.mrb[0].mxu0 %v427
        %v922 = vpop.f32.mrb[0].mxu0
        %v923 = vadd.f32 %v698, %v922
        %v924 = vpop.f32.mrb[0].mxu0
        %925 = vmatprep.mubr.f32.mxu0 %v432
        %926 = vmatmul.mubr.f32.gmra.mrb[0].mxu0 %v431
        %v927 = vpop.f32.mrb[0].mxu0
        %v928 = vadd.f32 %v703, %v927
        %v929 = vpop.f32.mrb[0].mxu0
        %930 = vmatprep.mubr.f32.mxu0 %v436
        %931 = vmatmul.mubr.f32.gmra.mrb[0].mxu0 %v435
        %v932 = vpop.f32.mrb[0].mxu0
        %v933 = vadd.f32 %v708, %v932
        %v934 = vpop.f32.mrb[0].mxu0
        %935 = vmatprep.mubr.f32.mxu0 %v440
        %936 = vmatmul.mubr.f32.gmra.mrb[0].mxu0 %v439
        %v937 = vpop.f32.mrb[0].mxu0
        %v938 = vadd.f32 %v713, %v937
        %v939 = vpop.f32.mrb[0].mxu0
        %940 = vmatprep.mubr.f32.mxu0 %v444
        %941 = vmatmul.mubr.f32.gmra.mrb[0].mxu0 %v443
        %v942 = vpop.f32.mrb[0].mxu0
        %v943 = vadd.f32 %v718, %v942
        %v944 = vpop.f32.mrb[0].mxu0
        %945 = vmatprep.mubr.f32.mxu0 %v448
        %946 = vmatmul.mubr.f32.gmra.mrb[0].mxu0 %v447
        %v947 = vpop.f32.mrb[0].mxu0
        %v948 = vadd.f32 %v723, %v947
        %v949 = vpop.f32.mrb[0].mxu0
        %950 = vmatprep.mubr.f32.mxu0 %v452
        %951 = vmatmul.mubr.f32.gmra.mrb[0].mxu0 %v451
        %v952 = vpop.f32.mrb[0].mxu0
        %v953 = vadd.f32 %v728, %v952
        %v954 = vpop.f32.mrb[0].mxu0
        %955 = vmatprep.mubr.f32.mxu0 %v456
        %956 = vmatmul.mubr.f32.gmra.mrb[0].mxu0 %v455
        %v957 = vpop.f32.mrb[0].mxu0
        %v958 = vadd.f32 %v733, %v957
        %v959 = vpop.f32.mrb[0].mxu0
        %960 = vmatprep.mubr.f32.mxu0 %v460
        %961 = vmatmul.mubr.f32.gmra.mrb[0].mxu0 %v459
        %v962 = vpop.f32.mrb[0].mxu0
        %v963 = vadd.f32 %v738, %v962
        %v964 = vpop.f32.mrb[0].mxu0
        %965 = vmatprep.mubr.f32.mxu0 %v464
        %966 = vmatmul.mubr.f32.gmra.mrb[0].mxu0 %v463
        %v967 = vpop.f32.mrb[0].mxu0
        %v968 = vadd.f32 %v743, %v967
        %v969 = vpop.f32.mrb[0].mxu0
        %970 = vmatprep.mubr.f32.mxu0 %v468
        %971 = vmatmul.mubr.f32.gmra.mrb[0].mxu0 %v467
        %v972 = vpop.f32.mrb[0].mxu0
        %v973 = vadd.f32 %v748, %v972
        %v974 = vpop.f32.mrb[0].mxu0
        %975 = vmatprep.mubr.f32.mxu0 %v472
        %976 = vmatmul.mubr.f32.gmra.mrb[0].mxu0 %v471
        %v977 = vpop.f32.mrb[0].mxu0
        %v978 = vadd.f32 %v753, %v977
        %v979 = vpop.f32.mrb[0].mxu0
        %980 = vmatprep.mubr.f32.mxu0 %v476
        %981 = vmatmul.mubr.f32.gmra.mrb[0].mxu0 %v475
        %v982 = vpop.f32.mrb[0].mxu0
        %v983 = vadd.f32 %v758, %v982
        %v984 = vpop.f32.mrb[0].mxu0
        %985 = vmatprep.mubr.f32.mxu0 %v480
        %986 = vmatmul.mubr.f32.gmra.mrb[0].mxu0 %v479
        %v987 = vpop.f32.mrb[0].mxu0
        %v988 = vadd.f32 %v763, %v987
        %v989 = vpop.f32.mrb[0].mxu0
        %990 = vmatprep.mubr.f32.mxu0 %v484
        %991 = vmatmul.mubr.f32.gmra.mrb[0].mxu0 %v483
        %v992 = vpop.f32.mrb[0].mxu0
        %v993 = vadd.f32 %v768, %v992
        %v994 = vpop.f32.mrb[0].mxu0
        %995 = vmatprep.mubr.f32.mxu0 %v488
        %996 = vmatmul.mubr.f32.gmra.mrb[0].mxu0 %v487
        %v997 = vpop.f32.mrb[0].mxu0
        %v998 = vadd.f32 %v773, %v997
        %v999 = vpop.f32.mrb[0].mxu0
        %1000 = vmatprep.mubr.f32.mxu0 %v492
        %1001 = vmatmul.mubr.f32.gmra.mrb[0].mxu0 %v491
        %v1002 = vpop.f32.mrb[0].mxu0
        %v1003 = vadd.f32 %v778, %v1002
        %v1004 = vpop.f32.mrb[0].mxu0
        %1005 = vmatprep.mubr.f32.mxu0 %v496
        %1006 = vmatmul.mubr.f32.gmra.mrb[0].mxu0 %v495
        %v1007 = vpop.f32.mrb[0].mxu0
        %v1008 = vadd.f32 %v783, %v1007
        %v1009 = vpop.f32.mrb[0].mxu0
        %1010 = vdwg.mxu0
        %v1011 = vadd.f32 %v337, %v853
        %v1012 = vadd.f32 %v338, %v858
        %v1013 = vadd.f32 %v339, %v863
        %v1014 = vadd.f32 %v340, %v868
        %v1015 = vadd.f32 %v341, %v873
        %v1016 = vadd.f32 %v342, %v878
        %v1017 = vadd.f32 %v343, %v883
        %v1018 = vadd.f32 %v344, %v888
        %v1019 = vadd.f32 %v345, %v893
        %v1020 = vadd.f32 %v346, %v898
        %v1021 = vadd.f32 %v347, %v903
        %v1022 = vadd.f32 %v348, %v908
        %v1023 = vadd.f32 %v349, %v913
        %v1024 = vadd.f32 %v350, %v918
        %v1025 = vadd.f32 %v351, %v923
        %v1026 = vadd.f32 %v352, %v928
        %v1027 = vadd.f32 %v353, %v933
        %v1028 = vadd.f32 %v354, %v938
        %v1029 = vadd.f32 %v355, %v943
        %v1030 = vadd.f32 %v356, %v948
        %v1031 = vadd.f32 %v357, %v953
        %v1032 = vadd.f32 %v358, %v958
        %v1033 = vadd.f32 %v359, %v963
        %v1034 = vadd.f32 %v360, %v968
        %v1035 = vadd.f32 %v361, %v973
        %v1036 = vadd.f32 %v362, %v978
        %v1037 = vadd.f32 %v363, %v983
        %v1038 = vadd.f32 %v364, %v988
        %v1039 = vadd.f32 %v365, %v993
        %v1040 = vadd.f32 %v366, %v998
        %v1041 = vadd.f32 %v367, %v1003
        %v1042 = vadd.f32 %v368, %v1008
        %1043 = vst [vmem:[%s289] sm:$0xff] %v1011
        %1044 = vst [vmem:[%s289 + $0x8] sm:$0xff] %v1012
        %1045 = vst [vmem:[%s289 + $0x10] sm:$0xff] %v1013
        %1046 = vst [vmem:[%s289 + $0x18] sm:$0xff] %v1014
        %1047 = vst [vmem:[%s289 + $0x20] sm:$0xff] %v1015
        %1048 = vst [vmem:[%s289 + $0x28] sm:$0xff] %v1016
        %1049 = vst [vmem:[%s289 + $0x30] sm:$0xff] %v1017
        %1050 = vst [vmem:[%s289 + $0x38] sm:$0xff] %v1018
        %1051 = vst [vmem:[%s289 + $0x40] sm:$0xff] %v1019
        %1052 = vst [vmem:[%s289 + $0x48] sm:$0xff] %v1020
        %1053 = vst [vmem:[%s289 + $0x50] sm:$0xff] %v1021
        %1054 = vst [vmem:[%s289 + $0x58] sm:$0xff] %v1022
        %1055 = vst [vmem:[%s289 + $0x60] sm:$0xff] %v1023
        %1056 = vst [vmem:[%s289 + $0x68] sm:$0xff] %v1024
        %1057 = vst [vmem:[%s289 + $0x70] sm:$0xff] %v1025
        %1058 = vst [vmem:[%s289 + $0x78] sm:$0xff] %v1026
        %1059 = vst [vmem:[%s289 + $0x80] sm:$0xff] %v1027
        %1060 = vst [vmem:[%s289 + $0x88] sm:$0xff] %v1028
        %1061 = vst [vmem:[%s289 + $0x90] sm:$0xff] %v1029
        %1062 = vst [vmem:[%s289 + $0x98] sm:$0xff] %v1030
        %1063 = vst [vmem:[%s289 + $0xa0] sm:$0xff] %v1031
        %1064 = vst [vmem:[%s289 + $0xa8] sm:$0xff] %v1032
        %1065 = vst [vmem:[%s289 + $0xb0] sm:$0xff] %v1033
        %1066 = vst [vmem:[%s289 + $0xb8] sm:$0xff] %v1034
        %1067 = vst [vmem:[%s289 + $0xc0] sm:$0xff] %v1035
        %1068 = vst [vmem:[%s289 + $0xc8] sm:$0xff] %v1036
        %1069 = vst [vmem:[%s289 + $0xd0] sm:$0xff] %v1037
        %1070 = vst [vmem:[%s289 + $0xd8] sm:$0xff] %v1038
        %1071 = vst [vmem:[%s289 + $0xe0] sm:$0xff] %v1039
        %1072 = vst [vmem:[%s289 + $0xe8] sm:$0xff] %v1040
        %1073 = vst [vmem:[%s289 + $0xf0] sm:$0xff] %v1041
        %1074 = vst [vmem:[%s289 + $0xf8] sm:$0xff] %v1042
        %s1075 = sand.u32 %s134, 1
        %s1076 = scalar_lea.sflag [#allocation4], %s1075
        %s1077 = sand.u32 %s134, 1
        %s1078 = smul.addr %s1077, 256
        %s1079 = scalar_lea.vmem [#allocation8], %s1078
        // Predicated region
        $region49: #{tpu_custom_call.1} parent=31 // pred_check
          %p1080 = pneg %p144
        $region50: #{tpu_custom_call.1} parent=31 // pred_check_branch
          %1082 = sbr.rel (%p1080) target = $region52
        $region51: #{tpu_custom_call.1} parent=31 // pred_region
          %s1083 = smul.u32 32, %s28
          %s1085 = ssub.s32 4096, 4096
          %1086 = vsyncadd %s1076, %s1085
          %s1087 = smul.addr %s1083, 3
          %s1088 = sadd.s32 %s29, %s1087
          %s1089 = smul.addr %s1088, 128
          %s1090 = scalar_lea.hbm %s3, %s1089
          %s1091 = sshll.u32 %s1079, 4
          %s1092 = int_to_ptr.vmem [resolvable:$true] %s1091
          %1097 = dma.vmem_to_hbm [thread:$0]  %s1092, 4096, %s1090, %s1076, 128, 384, 8
        $region52: #{tpu_custom_call.1} parent=31 // pred_fallthru
          _
      $region32: #{tpu_custom_call.1} parent=5 // pred_fallthru
        _
      %p1098 = scmp.le.s32.totalorder 2, %s18
      // Predicated region
      $region53: #{tpu_custom_call.1} parent=5 // pred_check
        %p1099 = pneg %p1098
      $region54: #{tpu_custom_call.1} parent=5 // pred_check_branch
        %1101 = sbr.rel (%p1099) target = $region56
      $region55: #{tpu_custom_call.1} parent=5 // pred_region
        %s1102 = ssub.s32 %s18, 2
        // Predicated region
        $region57: #{tpu_custom_call.1} parent=55 // pred_check
          %p1103 = pneg %p150
        $region58: #{tpu_custom_call.1} parent=55 // pred_check_branch
          %1105 = sbr.rel (%p1103) target = $region60
        $region59: #{tpu_custom_call.1} parent=55 // pred_region
          %s1106 = sand.u32 %s135, 1
          %s1107 = scalar_lea.sflag [#allocation4], %s1106
          %s1108 = sand.u32 %s135, 1
          %s1109 = smul.addr %s1108, 256
          %s1110 = scalar_lea.vmem [#allocation8], %s1109
          %1111 = dma.done %s1107, 4096
        $region60: #{tpu_custom_call.1} parent=55 // pred_fallthru
          _
      $region56: #{tpu_custom_call.1} parent=5 // pred_fallthru
        _
    $region6: #{tpu_custom_call.1} parent=1 // loop_footer
      %s22 = sadd.s32 1, %s18
    $region7: #{tpu_custom_call.1} parent=1 // loop_footer_branch
      %17 = sbr.rel target = $region3
    $region8: #{tpu_custom_call.1} parent=1 // loop_exit
      _
    %1112 = vsyncpa [#allocation3], 1
    %s1113 = scalar_lea.sflag [#allocation3], 1
    %1114 = vsyncpa %s1113, 1
    %1115 = vsyncpa [#allocation6], 1
    %s1116 = scalar_lea.sflag [#allocation6], 1
    %1117 = vsyncpa %s1116, 1
    %1118 = vsyncpa [#allocation4], 1
    %s1119 = scalar_lea.sflag [#allocation4], 1
    %1120 = vsyncpa %s1119, 1

</llo_original>
